<compile_context>
chip_gen: v5e
topology: v5e:2x2
jax: 0.10.0
libtpu: 0.0.40
codegen_flags: <defaults>
</compile_context>

<pallas_src>
import functools
import math

import jax
import jax.numpy as jnp
from jax.experimental import pallas as pl
from jax.experimental.pallas import tpu as pltpu


# ----------------------------------------------------------------------------
# Weight construction (PyTorch align_corners=False semantics)
# ----------------------------------------------------------------------------
def _bilinear_weight_matrix(in_size: int, out_size: int) -> jnp.ndarray:
    """1-D bilinear interpolation weights, shape (out, in), f32."""
    scale = in_size / out_size
    dst = jnp.arange(out_size, dtype=jnp.float32)
    src = (dst + 0.5) * scale - 0.5
    src = jnp.maximum(src, 0.0)                      # PyTorch clamps negative src
    i0 = jnp.floor(src).astype(jnp.int32)
    i0 = jnp.minimum(i0, in_size - 1)
    i1 = jnp.minimum(i0 + 1, in_size - 1)
    l1 = src - i0.astype(jnp.float32)
    l0 = 1.0 - l1
    rows = jnp.arange(out_size)
    w = jnp.zeros((out_size, in_size), jnp.float32)
    w = w.at[rows, i0].add(l0)
    w = w.at[rows, i1].add(l1)
    return w


# ----------------------------------------------------------------------------
# Kernels
# ----------------------------------------------------------------------------
def _plane_resize_f32(xc, wy, wxt):
    """One plane: (IH,IW) f32 -> (OH,OW) f32 via two MXU matmuls (cheaper order)."""
    oh, ih = wy.shape
    iw, ow = wxt.shape
    if oh * iw * (ih + ow) <= ih * ow * (iw + oh):
        u = jnp.dot(wy, xc, preferred_element_type=jnp.float32)       # (OH, IW)
        return jnp.dot(u, wxt, preferred_element_type=jnp.float32)    # (OH, OW)
    u = jnp.dot(xc, wxt, preferred_element_type=jnp.float32)          # (IH, OW)
    return jnp.dot(wy, u, preferred_element_type=jnp.float32)         # (OH, OW)


def _resize_kernel_natural(x_ref, wy_ref, wxt_ref, o_ref):
    """Natural-layout path (OW >= 128): in (TC,IH,IW) -> out (TC,OH,OW)."""
    tc = x_ref.shape[0]
    wy = wy_ref[...]
    wxt = wxt_ref[...]

    def body(c, carry):
        xc = x_ref[c].astype(jnp.float32)                              # (IH, IW)
        o_ref[c] = _plane_resize_f32(xc, wy, wxt).astype(o_ref.dtype)  # (OH, OW)
        return carry

    jax.lax.fori_loop(0, tc, body, 0)


def _resize_kernel_interleaved(x_ref, wy_ref, wxt_ref, o_ref):
    """Small-OW path: in (TC,IH,IW) -> lane-dense slab (1, OH, TC*OW)."""
    tc = x_ref.shape[0]
    wy = wy_ref[...]
    wxt = wxt_ref[...]
    cols = [_plane_resize_f32(x_ref[c].astype(jnp.float32), wy, wxt)
            for c in range(tc)]                                        # static unroll
    o_ref[0] = jnp.concatenate(cols, axis=-1).astype(o_ref.dtype)      # (OH, TC*OW)


# ----------------------------------------------------------------------------
# VMEM accounting / tile selection helpers (all trace-time Python ints)
# ----------------------------------------------------------------------------
def _ru(x, m):
    return (x + m - 1) // m * m


def _tile_bytes(rows, cols, itemsize):
    """Conservative VMEM footprint of a (rows, cols) tile incl. lane/sublane padding."""
    sub = 8 * (4 // itemsize) if itemsize in (1, 2, 4) else 8
    return _ru(rows, sub) * _ru(cols, 128) * itemsize


def _vmem_capacity_bytes():
    try:
        info = pltpu.get_tpu_info()
        cap = getattr(info, "vmem_capacity_bytes", None)
        if cap:
            return int(cap)
    except Exception:
        pass
    return 64 * 1024 * 1024   # conservative fallback (v7x per-TensorCore VMEM)


def _largest_divisor_leq(n, cap):
    cap = max(1, min(int(cap), n))
    for d in range(cap, 0, -1):
        if n % d == 0:
            return d
    return 1


# ----------------------------------------------------------------------------
# Public wrapper
# ----------------------------------------------------------------------------
@functools.partial(jax.jit, static_argnums=(1,))
def bilinear_resize(x: jnp.ndarray, size) -> jnp.ndarray:
    """Resize NCHW `x` to spatial `size` with bilinear, align_corners=False."""
    if isinstance(size, int):
        size = (size, size)
    oh, ow = int(size[0]), int(size[1])
    n, c, ih, iw = x.shape
    nc = n * c
    it = x.dtype.itemsize

    wy = _bilinear_weight_matrix(ih, oh)        # (OH, IH) f32, resident
    wxt = _bilinear_weight_matrix(iw, ow).T     # (IW, OW) f32, resident

    x_flat = x.reshape(nc, ih, iw)              # free (collapses leading dims only)

    # Corrected VMEM accounting: lane/sublane padding, x2 double buffering for
    # in/out blocks, f32 temporaries, resident weights, plus compiler slack.
    vmem_cap = _vmem_capacity_bytes()
    budget = int(0.40 * vmem_cap)
    vmem_limit = int(0.70 * vmem_cap)
    fixed = (2 * (_tile_bytes(oh, ih, 4) + _tile_bytes(iw, ow, 4))      # weights (2-buf)
             + _tile_bytes(ih, iw, 4) + _tile_bytes(oh, iw, 4)          # f32 temps
             + _tile_bytes(ih, ow, 4) + _tile_bytes(oh, ow, 4)
             + (2 << 20))                                               # slack
    cparams = pltpu.CompilerParams(dimension_semantics=("parallel",),
                                   vmem_limit_bytes=vmem_limit)

    if ow >= 128:
        # ---------- natural-layout fast path: zero wrapper HBM plumbing -------
        per_plane = 2 * _tile_bytes(ih, iw, it) + 2 * _tile_bytes(oh, ow, it)
        cap = max(1, (budget - fixed) // per_plane)
        if nc >= 2:
            cap = min(cap, max(1, nc // 2))     # grid >= 2 steps (v7x megacore)
        tc = _largest_divisor_leq(nc, cap)
        g = nc // tc
        out = pl.pallas_call(
            _resize_kernel_natural,
            out_shape=jax.ShapeDtypeStruct((nc, oh, ow), x.dtype),
            grid=(g,),
            in_specs=[
                pl.BlockSpec((tc, ih, iw), lambda i: (i, 0, 0)),
                pl.BlockSpec((oh, ih), lambda i: (0, 0)),       # resident weights
                pl.BlockSpec((iw, ow), lambda i: (0, 0)),       # resident weights
            ],
            out_specs=pl.BlockSpec((tc, oh, ow), lambda i: (i, 0, 0)),
            compiler_params=cparams,
        )(x_flat, wy, wxt)
        return out.reshape(n, c, oh, ow)

    # ---------- OW < 128: lane-dense interleaved output slab ------------------
    per_plane = (2 * _tile_bytes(ih, iw, it)           # input block, double-buffered
                 + 2 * _ru(oh, 8) * ow * it            # share of slab out block, x2
                 + _ru(oh, 8) * ow * 4)                # share of f32 concat temp
    cap = max(1, (budget - fixed) // per_plane)
    cap = min(cap, 64, nc)                             # bound static unroll width
    tc0 = 128 // math.gcd(ow, 128)                     # min TC with TC*OW % 128 == 0
    tc = None
    for d in range(cap, 0, -1):                        # prefer 128-multiple slab width
        if nc % d == 0 and d % tc0 == 0:
            tc = d
            break
    if tc is None:
        for d in range(cap, 0, -1):                    # else at least >= 128 lanes
            if nc % d == 0 and d * ow >= 128:
                tc = d
                break
    if tc is None:
        tc = _largest_divisor_leq(nc, cap)
    g = nc // tc

    out = pl.pallas_call(
        _resize_kernel_interleaved,
        out_shape=jax.ShapeDtypeStruct((g, oh, tc * ow), x.dtype),
        grid=(g,),
        in_specs=[
            pl.BlockSpec((tc, ih, iw), lambda i: (i, 0, 0)),
            pl.BlockSpec((oh, ih), lambda i: (0, 0)),
            pl.BlockSpec((iw, ow), lambda i: (0, 0)),
        ],
        out_specs=pl.BlockSpec((1, oh, tc * ow), lambda i: (i, 0, 0)),
        compiler_params=cparams,
    )(x_flat, wy, wxt)
    # Single output-sized relayout, only on the narrow-OW path.
    out = out.reshape(g, oh, tc, ow).transpose(0, 2, 1, 3).reshape(nc, oh, ow)
    return out.reshape(n, c, oh, ow)


def bilinear_align_module(inputs, size):
    """Pallas equivalent of Bilinear_AlignModule.forward (list in, list out)."""
    return [bilinear_resize(x, size) for x in inputs]


def _reference_resize(x, size):
    """Pure-JAX reference using the same separable weights (einsum)."""
    if isinstance(size, int):
        size = (size, size)
    oh, ow = size
    _, _, ih, iw = x.shape
    wy = _bilinear_weight_matrix(ih, oh)
    wx = _bilinear_weight_matrix(iw, ow)
    return jnp.einsum("oh,nchw,pw->ncop", wy, x.astype(jnp.float32), wx)


if __name__ == "__main__":
    key = jax.random.PRNGKey(0)
    k1, k2, k3 = jax.random.split(key, 3)

    # Feature-pyramid-style inputs (NCHW) at different resolutions.
    x1 = jax.random.normal(k1, (2, 4, 16, 16), dtype=jnp.float32)
    x2 = jax.random.normal(k2, (2, 4, 8, 8), dtype=jnp.float32)

    # 1) Small-target path (OW < 128 -> lane-dense interleaved slab).
    target_size = (24, 24)
    outs = bilinear_align_module([x1, x2], target_size)
    outs = [jax.block_until_ready(o) for o in outs]
    for xin, o in zip([x1, x2], outs):
        ref = _reference_resize(xin, target_size)
        assert o.shape == (2, 4, 24, 24)
        assert jnp.max(jnp.abs(o - ref)) < 1e-4

    # 2) Natural-layout fast path (OW >= 128) with a multi-step grid (g >= 2).
    x3 = jax.random.normal(k3, (2, 4, 16, 20), dtype=jnp.float32)
    o3 = jax.block_until_ready(bilinear_resize(x3, (128, 160)))
    ref3 = _reference_resize(x3, (128, 160))
    assert o3.shape == (2, 4, 128, 160)
    assert jnp.max(jnp.abs(o3 - ref3)) < 1e-4

    # 3) bf16 input path (f32 compute inside the kernel, cast back to bf16).
    x4 = x1.astype(jnp.bfloat16)
    o4 = jax.block_until_ready(bilinear_resize(x4, target_size))
    ref4 = _reference_resize(x4, target_size)
    assert o4.dtype == jnp.bfloat16
    assert jnp.max(jnp.abs(o4.astype(jnp.float32) - ref4)) < 3e-2

    print("KERNEL_OK")
</pallas_src>

<mosaic_0001>
module attributes {stable_mosaic.version = 11 : i64} {
  func.func @_resize_kernel_interleaved(%arg0: i32, %arg1: memref<8x16x16xf32, #tpu.memory_space<vmem>>, %arg2: memref<24x16xf32, #tpu.memory_space<vmem>>, %arg3: memref<16x24xf32, #tpu.memory_space<vmem>>, %arg4: memref<1x24x192xf32, #tpu.memory_space<vmem>>) attributes {dimension_semantics = [#tpu.dimension_semantics<parallel>], iteration_bounds = array<i64: 1>, scalar_prefetch = 0 : i64, scratch_operands = 0 : i64, tpu.core_type = #tpu.core_type<tc>, window_params = [{transform_indices = @transform_0, window_bounds = array<i64: 8, 16, 16>}, {pipeline_mode = #tpu.pipeline_mode<synchronous>, transform_indices = @transform_1, window_bounds = array<i64: 24, 16>}, {pipeline_mode = #tpu.pipeline_mode<synchronous>, transform_indices = @transform_2, window_bounds = array<i64: 16, 24>}, {transform_indices = @transform_3, window_bounds = array<i64: 1, 24, 192>}]} {
    %c0 = arith.constant 0 : index
    %c0_0 = arith.constant 0 : index
    %0 = vector.load %arg2[%c0, %c0_0] : memref<24x16xf32, #tpu.memory_space<vmem>>, vector<24x16xf32>
    %c0_1 = arith.constant 0 : index
    %c0_2 = arith.constant 0 : index
    %1 = vector.load %arg3[%c0_1, %c0_2] : memref<16x24xf32, #tpu.memory_space<vmem>>, vector<16x24xf32>
    %c0_3 = arith.constant 0 : index
    %c0_4 = arith.constant 0 : index
    %c0_5 = arith.constant 0 : index
    %2 = vector.load %arg1[%c0_3, %c0_4, %c0_5] : memref<8x16x16xf32, #tpu.memory_space<vmem>>, vector<1x16x16xf32>
    %3 = vector.shape_cast %2 : vector<1x16x16xf32> to vector<16x16xf32>
    %cst = arith.constant dense<0.000000e+00> : vector<24x16xf32>
    %4 = tpu.matmul %0, %3, %cst {dimension_numbers = #tpu.dot_dimension_numbers<[1], [0], [0], [1], [0, 0, 1, 1], [], []>} : vector<24x16xf32>, vector<16x16xf32>, vector<24x16xf32> -> vector<24x16xf32>
    %cst_6 = arith.constant dense<0.000000e+00> : vector<24x24xf32>
    %5 = tpu.matmul %4, %1, %cst_6 {dimension_numbers = #tpu.dot_dimension_numbers<[1], [0], [0], [1], [0, 0, 1, 1], [], []>} : vector<24x16xf32>, vector<16x24xf32>, vector<24x24xf32> -> vector<24x24xf32>
    %c1 = arith.constant 1 : index
    %c0_7 = arith.constant 0 : index
    %c0_8 = arith.constant 0 : index
    %6 = vector.load %arg1[%c1, %c0_7, %c0_8] : memref<8x16x16xf32, #tpu.memory_space<vmem>>, vector<1x16x16xf32>
    %7 = vector.shape_cast %6 : vector<1x16x16xf32> to vector<16x16xf32>
    %cst_9 = arith.constant dense<0.000000e+00> : vector<24x16xf32>
    %8 = tpu.matmul %0, %7, %cst_9 {dimension_numbers = #tpu.dot_dimension_numbers<[1], [0], [0], [1], [0, 0, 1, 1], [], []>} : vector<24x16xf32>, vector<16x16xf32>, vector<24x16xf32> -> vector<24x16xf32>
    %cst_10 = arith.constant dense<0.000000e+00> : vector<24x24xf32>
    %9 = tpu.matmul %8, %1, %cst_10 {dimension_numbers = #tpu.dot_dimension_numbers<[1], [0], [0], [1], [0, 0, 1, 1], [], []>} : vector<24x16xf32>, vector<16x24xf32>, vector<24x24xf32> -> vector<24x24xf32>
    %c2 = arith.constant 2 : index
    %c0_11 = arith.constant 0 : index
    %c0_12 = arith.constant 0 : index
    %10 = vector.load %arg1[%c2, %c0_11, %c0_12] : memref<8x16x16xf32, #tpu.memory_space<vmem>>, vector<1x16x16xf32>
    %11 = vector.shape_cast %10 : vector<1x16x16xf32> to vector<16x16xf32>
    %cst_13 = arith.constant dense<0.000000e+00> : vector<24x16xf32>
    %12 = tpu.matmul %0, %11, %cst_13 {dimension_numbers = #tpu.dot_dimension_numbers<[1], [0], [0], [1], [0, 0, 1, 1], [], []>} : vector<24x16xf32>, vector<16x16xf32>, vector<24x16xf32> -> vector<24x16xf32>
    %cst_14 = arith.constant dense<0.000000e+00> : vector<24x24xf32>
    %13 = tpu.matmul %12, %1, %cst_14 {dimension_numbers = #tpu.dot_dimension_numbers<[1], [0], [0], [1], [0, 0, 1, 1], [], []>} : vector<24x16xf32>, vector<16x24xf32>, vector<24x24xf32> -> vector<24x24xf32>
    %c3 = arith.constant 3 : index
    %c0_15 = arith.constant 0 : index
    %c0_16 = arith.constant 0 : index
    %14 = vector.load %arg1[%c3, %c0_15, %c0_16] : memref<8x16x16xf32, #tpu.memory_space<vmem>>, vector<1x16x16xf32>
    %15 = vector.shape_cast %14 : vector<1x16x16xf32> to vector<16x16xf32>
    %cst_17 = arith.constant dense<0.000000e+00> : vector<24x16xf32>
    %16 = tpu.matmul %0, %15, %cst_17 {dimension_numbers = #tpu.dot_dimension_numbers<[1], [0], [0], [1], [0, 0, 1, 1], [], []>} : vector<24x16xf32>, vector<16x16xf32>, vector<24x16xf32> -> vector<24x16xf32>
    %cst_18 = arith.constant dense<0.000000e+00> : vector<24x24xf32>
    %17 = tpu.matmul %16, %1, %cst_18 {dimension_numbers = #tpu.dot_dimension_numbers<[1], [0], [0], [1], [0, 0, 1, 1], [], []>} : vector<24x16xf32>, vector<16x24xf32>, vector<24x24xf32> -> vector<24x24xf32>
    %c4 = arith.constant 4 : index
    %c0_19 = arith.constant 0 : index
    %c0_20 = arith.constant 0 : index
    %18 = vector.load %arg1[%c4, %c0_19, %c0_20] : memref<8x16x16xf32, #tpu.memory_space<vmem>>, vector<1x16x16xf32>
    %19 = vector.shape_cast %18 : vector<1x16x16xf32> to vector<16x16xf32>
    %cst_21 = arith.constant dense<0.000000e+00> : vector<24x16xf32>
    %20 = tpu.matmul %0, %19, %cst_21 {dimension_numbers = #tpu.dot_dimension_numbers<[1], [0], [0], [1], [0, 0, 1, 1], [], []>} : vector<24x16xf32>, vector<16x16xf32>, vector<24x16xf32> -> vector<24x16xf32>
    %cst_22 = arith.constant dense<0.000000e+00> : vector<24x24xf32>
    %21 = tpu.matmul %20, %1, %cst_22 {dimension_numbers = #tpu.dot_dimension_numbers<[1], [0], [0], [1], [0, 0, 1, 1], [], []>} : vector<24x16xf32>, vector<16x24xf32>, vector<24x24xf32> -> vector<24x24xf32>
    %c5 = arith.constant 5 : index
    %c0_23 = arith.constant 0 : index
    %c0_24 = arith.constant 0 : index
    %22 = vector.load %arg1[%c5, %c0_23, %c0_24] : memref<8x16x16xf32, #tpu.memory_space<vmem>>, vector<1x16x16xf32>
    %23 = vector.shape_cast %22 : vector<1x16x16xf32> to vector<16x16xf32>
    %cst_25 = arith.constant dense<0.000000e+00> : vector<24x16xf32>
    %24 = tpu.matmul %0, %23, %cst_25 {dimension_numbers = #tpu.dot_dimension_numbers<[1], [0], [0], [1], [0, 0, 1, 1], [], []>} : vector<24x16xf32>, vector<16x16xf32>, vector<24x16xf32> -> vector<24x16xf32>
    %cst_26 = arith.constant dense<0.000000e+00> : vector<24x24xf32>
    %25 = tpu.matmul %24, %1, %cst_26 {dimension_numbers = #tpu.dot_dimension_numbers<[1], [0], [0], [1], [0, 0, 1, 1], [], []>} : vector<24x16xf32>, vector<16x24xf32>, vector<24x24xf32> -> vector<24x24xf32>
    %c6 = arith.constant 6 : index
    %c0_27 = arith.constant 0 : index
    %c0_28 = arith.constant 0 : index
    %26 = vector.load %arg1[%c6, %c0_27, %c0_28] : memref<8x16x16xf32, #tpu.memory_space<vmem>>, vector<1x16x16xf32>
    %27 = vector.shape_cast %26 : vector<1x16x16xf32> to vector<16x16xf32>
    %cst_29 = arith.constant dense<0.000000e+00> : vector<24x16xf32>
    %28 = tpu.matmul %0, %27, %cst_29 {dimension_numbers = #tpu.dot_dimension_numbers<[1], [0], [0], [1], [0, 0, 1, 1], [], []>} : vector<24x16xf32>, vector<16x16xf32>, vector<24x16xf32> -> vector<24x16xf32>
    %cst_30 = arith.constant dense<0.000000e+00> : vector<24x24xf32>
    %29 = tpu.matmul %28, %1, %cst_30 {dimension_numbers = #tpu.dot_dimension_numbers<[1], [0], [0], [1], [0, 0, 1, 1], [], []>} : vector<24x16xf32>, vector<16x24xf32>, vector<24x24xf32> -> vector<24x24xf32>
    %c7 = arith.constant 7 : index
    %c0_31 = arith.constant 0 : index
    %c0_32 = arith.constant 0 : index
    %30 = vector.load %arg1[%c7, %c0_31, %c0_32] : memref<8x16x16xf32, #tpu.memory_space<vmem>>, vector<1x16x16xf32>
    %31 = vector.shape_cast %30 : vector<1x16x16xf32> to vector<16x16xf32>
    %cst_33 = arith.constant dense<0.000000e+00> : vector<24x16xf32>
    %32 = tpu.matmul %0, %31, %cst_33 {dimension_numbers = #tpu.dot_dimension_numbers<[1], [0], [0], [1], [0, 0, 1, 1], [], []>} : vector<24x16xf32>, vector<16x16xf32>, vector<24x16xf32> -> vector<24x16xf32>
    %cst_34 = arith.constant dense<0.000000e+00> : vector<24x24xf32>
    %33 = tpu.matmul %32, %1, %cst_34 {dimension_numbers = #tpu.dot_dimension_numbers<[1], [0], [0], [1], [0, 0, 1, 1], [], []>} : vector<24x16xf32>, vector<16x24xf32>, vector<24x24xf32> -> vector<24x24xf32>
    %34 = tpu.concatenate %5, %9, %13, %17, %21, %25, %29, %33 in 1 : vector<24x24xf32>, vector<24x24xf32>, vector<24x24xf32>, vector<24x24xf32>, vector<24x24xf32>, vector<24x24xf32>, vector<24x24xf32>, vector<24x24xf32> -> vector<24x192xf32>
    %c0_35 = arith.constant 0 : index
    %c0_36 = arith.constant 0 : index
    %c0_37 = arith.constant 0 : index
    %35 = vector.load %arg4[%c0_35, %c0_36, %c0_37] : memref<1x24x192xf32, #tpu.memory_space<vmem>>, vector<1x24x192xf32>
    %36 = vector.shape_cast %35 : vector<1x24x192xf32> to vector<24x192xf32>
    %37 = vector.shape_cast %34 : vector<24x192xf32> to vector<1x24x192xf32>
    tpu.vector_store %arg4[%c0_35, %c0_36, %c0_37], %37 {strides = array<i32>} : memref<1x24x192xf32, #tpu.memory_space<vmem>>, vector<1x24x192xf32>,
    return
  }
  func.func @transform_0(%arg0: i32) -> (i32, i32, i32) {
    %c0_i32 = arith.constant 0 : i32
    %c0_i32_0 = arith.constant 0 : i32
    %c0_i32_1 = arith.constant 0 : i32
    return %arg0, %c0_i32, %c0_i32_0 : i32, i32, i32
  }
  func.func @transform_1(%arg0: i32) -> (i32, i32) {
    %c0_i32 = arith.constant 0 : i32
    %c0_i32_0 = arith.constant 0 : i32
    %c0_i32_1 = arith.constant 0 : i32
    return %c0_i32, %c0_i32_0 : i32, i32
  }
  func.func @transform_2(%arg0: i32) -> (i32, i32) {
    %c0_i32 = arith.constant 0 : i32
    %c0_i32_0 = arith.constant 0 : i32
    %c0_i32_1 = arith.constant 0 : i32
    return %c0_i32, %c0_i32_0 : i32, i32
  }
  func.func @transform_3(%arg0: i32) -> (i32, i32, i32) {
    %c0_i32 = arith.constant 0 : i32
    %c0_i32_0 = arith.constant 0 : i32
    %c0_i32_1 = arith.constant 0 : i32
    return %arg0, %c0_i32, %c0_i32_0 : i32, i32, i32
  }
}

</mosaic_0001>

<llo_original>
// kernel: bilinear_resize.1
$region0: #{bilinear_resize.1}
  #allocation0 [shape = 'u32[]', space=smem, size = 0x4, offset = 0x4, fixed_abs, tag = 'smem constant byte address 0x4 - core index']
  #allocation1 [shape = 'u32[72,128]{1,0:T(1,128)}', space=vmem, size = 0x9000, scoped, tag = 'internal scratch']
  %s0 = inlined_call_operand.vmem [shape: f32[8,16,16], index: 0, kind: input, shape index: {}]
  %s1 = inlined_call_operand.vmem [shape: f32[24,16], index: 1, kind: input, shape index: {}]
  %s2 = inlined_call_operand.vmem [shape: f32[16,24], index: 2, kind: input, shape index: {}]
  %s3 = inlined_call_operand.vmem [shape: f32[1,24,192], index: 3, kind: output, shape index: {}]
  %s4 = sld [smem:[#allocation0]]
  $region22: #{bilinear_resize.1} parent=0
    _
  %s6 = ssub.s32 1, %s4
  %s7 = scalar_select 0, %s6, %s4
  // Predicated region
  $region2: #{bilinear_resize.1} parent=0 // pred_check
    _
  $region3: #{bilinear_resize.1} parent=0 // pred_check_branch
    %9 = sbr.rel (0) target = $region5
  $region4: #{bilinear_resize.1} parent=0 // pred_region
    _
  $region5: #{bilinear_resize.1} parent=0 // pred_fallthru
    _
  // Predicated region
  $region6: #{bilinear_resize.1} parent=0 // pred_check
    _
  $region7: #{bilinear_resize.1} parent=0 // pred_check_branch
    %11 = sbr.rel (0) target = $region9
  $region8: #{bilinear_resize.1} parent=0 // pred_region
    _
  $region9: #{bilinear_resize.1} parent=0 // pred_fallthru
    _
  // Predicated region
  $region10: #{bilinear_resize.1} parent=0 // pred_check
    _
  $region11: #{bilinear_resize.1} parent=0 // pred_check_branch
    %13 = sbr.rel (0) target = $region13
  $region12: #{bilinear_resize.1} parent=0 // pred_region
    _
  $region13: #{bilinear_resize.1} parent=0 // pred_fallthru
    _
  %v14 = vld [vmem:[%s1] sm:$0xff]
  %v15 = vld [vmem:[%s1 + $0x8] sm:$0xff]
  %v16 = vld [vmem:[%s1 + $0x10] sm:$0xff]
  %v17 = vld [vmem:[%s2] sm:$0xff]
  %v18 = vld [vmem:[%s2 + $0x8] sm:$0xff]
  %v19 = vld [vmem:[%s0] sm:$0xff]
  %v20 = vld [vmem:[%s0 + $0x8] sm:$0xff]
  %vm21 = vcmask 130048
  %v23 = vsel %vm21, %v14, 0
  %v26 = vsel %vm21, %v15, 0
  %v29 = vsel %vm21, %v16, 0
  %31 = vmatpush.msra.mxu0 0.0
  %32 = vmatpush.msra.mxu0 0.0
  %33 = vmatpush.msra.mxu0 0.0
  %34 = vmatpush.msra.mxu0 0.0
  %35 = vmatpush.msra.mxu0 0.0
  %36 = vmatpush.msra.mxu0 0.0
  %37 = vmatpush.msra.mxu0 0.0
  %38 = vmatpush.msra.mxu0 0.0
  %39 = vmatpush.msra.mxu0 0.0
  %40 = vmatpush.msra.mxu0 0.0
  %41 = vmatpush.msra.mxu0 0.0
  %42 = vmatpush.msra.mxu0 0.0
  %43 = vmatpush.msra.mxu0 0.0
  %44 = vmatpush.msra.mxu0 0.0
  %45 = vmatpush.msra.mxu0 %v20
  %46 = vmatpush.msra.mxu0 %v19
  %47 = vmatmul.f32.gmra.mxu0 %v23
  %v48 = vpop.f32.mrf.mxu0
  %v49 = vadd.f32 0.0, %v48
  %50 = vmatmul.f32.gmra.mxu0 %v26
  %v51 = vpop.f32.mrf.mxu0
  %v52 = vadd.f32 0.0, %v51
  %53 = vmatmul.f32.gmra.mxu0 %v29
  %v54 = vpop.f32.mrf.mxu0
  %v55 = vadd.f32 0.0, %v54
  %56 = vdwg.mxu0
  %v58 = vsel %vm21, %v49, 0
  %v61 = vsel %vm21, %v52, 0
  %v64 = vsel %vm21, %v55, 0
  %66 = vmatpush.msra.mxu0 0.0
  %67 = vmatpush.msra.mxu0 0.0
  %68 = vmatpush.msra.mxu0 0.0
  %69 = vmatpush.msra.mxu0 0.0
  %70 = vmatpush.msra.mxu0 0.0
  %71 = vmatpush.msra.mxu0 0.0
  %72 = vmatpush.msra.mxu0 0.0
  %73 = vmatpush.msra.mxu0 0.0
  %74 = vmatpush.msra.mxu0 0.0
  %75 = vmatpush.msra.mxu0 0.0
  %76 = vmatpush.msra.mxu0 0.0
  %77 = vmatpush.msra.mxu0 0.0
  %78 = vmatpush.msra.mxu0 0.0
  %79 = vmatpush.msra.mxu0 0.0
  %80 = vmatpush.msra.mxu0 %v18
  %81 = vmatpush.msra.mxu0 %v17
  %82 = vmatmul.f32.gmra.mxu0 %v58
  %v83 = vpop.f32.mrf.mxu0
  %v84 = vadd.f32 0.0, %v83
  %85 = vmatmul.f32.gmra.mxu0 %v61
  %v86 = vpop.f32.mrf.mxu0
  %v87 = vadd.f32 0.0, %v86
  %88 = vmatmul.f32.gmra.mxu0 %v64
  %v89 = vpop.f32.mrf.mxu0
  %v90 = vadd.f32 0.0, %v89
  %91 = vdwg.mxu0
  %s92 = scalar_lea.vmem %s0, 16
  %v93 = vld [vmem:[%s92] sm:$0xff]
  %v94 = vld [vmem:[%s92 + $0x8] sm:$0xff]
  %95 = vmatpush.msra.mxu0 0.0
  %96 = vmatpush.msra.mxu0 0.0
  %97 = vmatpush.msra.mxu0 0.0
  %98 = vmatpush.msra.mxu0 0.0
  %99 = vmatpush.msra.mxu0 0.0
  %100 = vmatpush.msra.mxu0 0.0
  %101 = vmatpush.msra.mxu0 0.0
  %102 = vmatpush.msra.mxu0 0.0
  %103 = vmatpush.msra.mxu0 0.0
  %104 = vmatpush.msra.mxu0 0.0
  %105 = vmatpush.msra.mxu0 0.0
  %106 = vmatpush.msra.mxu0 0.0
  %107 = vmatpush.msra.mxu0 0.0
  %108 = vmatpush.msra.mxu0 0.0
  %109 = vmatpush.msra.mxu0 %v94
  %110 = vmatpush.msra.mxu0 %v93
  %111 = vmatmul.f32.gmra.mxu0 %v23
  %v112 = vpop.f32.mrf.mxu0
  %v113 = vadd.f32 0.0, %v112
  %114 = vmatmul.f32.gmra.mxu0 %v26
  %v115 = vpop.f32.mrf.mxu0
  %v116 = vadd.f32 0.0, %v115
  %117 = vmatmul.f32.gmra.mxu0 %v29
  %v118 = vpop.f32.mrf.mxu0
  %v119 = vadd.f32 0.0, %v118
  %120 = vdwg.mxu0
  %v122 = vsel %vm21, %v113, 0
  %v125 = vsel %vm21, %v116, 0
  %v128 = vsel %vm21, %v119, 0
  %130 = vmatpush.msra.mxu0 0.0
  %131 = vmatpush.msra.mxu0 0.0
  %132 = vmatpush.msra.mxu0 0.0
  %133 = vmatpush.msra.mxu0 0.0
  %134 = vmatpush.msra.mxu0 0.0
  %135 = vmatpush.msra.mxu0 0.0
  %136 = vmatpush.msra.mxu0 0.0
  %137 = vmatpush.msra.mxu0 0.0
  %138 = vmatpush.msra.mxu0 0.0
  %139 = vmatpush.msra.mxu0 0.0
  %140 = vmatpush.msra.mxu0 0.0
  %141 = vmatpush.msra.mxu0 0.0
  %142 = vmatpush.msra.mxu0 0.0
  %143 = vmatpush.msra.mxu0 0.0
  %144 = vmatpush.msra.mxu0 %v18
  %145 = vmatpush.msra.mxu0 %v17
  %146 = vmatmul.f32.gmra.mxu0 %v122
  %v147 = vpop.f32.mrf.mxu0
  %v148 = vadd.f32 0.0, %v147
  %149 = vmatmul.f32.gmra.mxu0 %v125
  %v150 = vpop.f32.mrf.mxu0
  %v151 = vadd.f32 0.0, %v150
  %152 = vmatmul.f32.gmra.mxu0 %v128
  %v153 = vpop.f32.mrf.mxu0
  %v154 = vadd.f32 0.0, %v153
  %155 = vdwg.mxu0
  %s156 = scalar_lea.vmem %s0, 32
  %v157 = vld [vmem:[%s156] sm:$0xff]
  %v158 = vld [vmem:[%s156 + $0x8] sm:$0xff]
  %159 = vmatpush.msra.mxu0 0.0
  %160 = vmatpush.msra.mxu0 0.0
  %161 = vmatpush.msra.mxu0 0.0
  %162 = vmatpush.msra.mxu0 0.0
  %163 = vmatpush.msra.mxu0 0.0
  %164 = vmatpush.msra.mxu0 0.0
  %165 = vmatpush.msra.mxu0 0.0
  %166 = vmatpush.msra.mxu0 0.0
  %167 = vmatpush.msra.mxu0 0.0
  %168 = vmatpush.msra.mxu0 0.0
  %169 = vmatpush.msra.mxu0 0.0
  %170 = vmatpush.msra.mxu0 0.0
  %171 = vmatpush.msra.mxu0 0.0
  %172 = vmatpush.msra.mxu0 0.0
  %173 = vmatpush.msra.mxu0 %v158
  %174 = vmatpush.msra.mxu0 %v157
  %175 = vmatmul.f32.gmra.mxu0 %v23
  %v176 = vpop.f32.mrf.mxu0
  %v177 = vadd.f32 0.0, %v176
  %178 = vmatmul.f32.gmra.mxu0 %v26
  %v179 = vpop.f32.mrf.mxu0
  %v180 = vadd.f32 0.0, %v179
  %181 = vmatmul.f32.gmra.mxu0 %v29
  %v182 = vpop.f32.mrf.mxu0
  %v183 = vadd.f32 0.0, %v182
  %184 = vdwg.mxu0
  %v186 = vsel %vm21, %v177, 0
  %v189 = vsel %vm21, %v180, 0
  %v192 = vsel %vm21, %v183, 0
  %194 = vmatpush.msra.mxu0 0.0
  %195 = vmatpush.msra.mxu0 0.0
  %196 = vmatpush.msra.mxu0 0.0
  %197 = vmatpush.msra.mxu0 0.0
  %198 = vmatpush.msra.mxu0 0.0
  %199 = vmatpush.msra.mxu0 0.0
  %200 = vmatpush.msra.mxu0 0.0
  %201 = vmatpush.msra.mxu0 0.0
  %202 = vmatpush.msra.mxu0 0.0
  %203 = vmatpush.msra.mxu0 0.0
  %204 = vmatpush.msra.mxu0 0.0
  %205 = vmatpush.msra.mxu0 0.0
  %206 = vmatpush.msra.mxu0 0.0
  %207 = vmatpush.msra.mxu0 0.0
  %208 = vmatpush.msra.mxu0 %v18
  %209 = vmatpush.msra.mxu0 %v17
  %210 = vmatmul.f32.gmra.mxu0 %v186
  %v211 = vpop.f32.mrf.mxu0
  %v212 = vadd.f32 0.0, %v211
  %213 = vmatmul.f32.gmra.mxu0 %v189
  %v214 = vpop.f32.mrf.mxu0
  %v215 = vadd.f32 0.0, %v214
  %216 = vmatmul.f32.gmra.mxu0 %v192
  %v217 = vpop.f32.mrf.mxu0
  %v218 = vadd.f32 0.0, %v217
  %219 = vdwg.mxu0
  %s220 = scalar_lea.vmem %s0, 48
  %v221 = vld [vmem:[%s220] sm:$0xff]
  %v222 = vld [vmem:[%s220 + $0x8] sm:$0xff]
  %223 = vmatpush.msra.mxu0 0.0
  %224 = vmatpush.msra.mxu0 0.0
  %225 = vmatpush.msra.mxu0 0.0
  %226 = vmatpush.msra.mxu0 0.0
  %227 = vmatpush.msra.mxu0 0.0
  %228 = vmatpush.msra.mxu0 0.0
  %229 = vmatpush.msra.mxu0 0.0
  %230 = vmatpush.msra.mxu0 0.0
  %231 = vmatpush.msra.mxu0 0.0
  %232 = vmatpush.msra.mxu0 0.0
  %233 = vmatpush.msra.mxu0 0.0
  %234 = vmatpush.msra.mxu0 0.0
  %235 = vmatpush.msra.mxu0 0.0
  %236 = vmatpush.msra.mxu0 0.0
  %237 = vmatpush.msra.mxu0 %v222
  %238 = vmatpush.msra.mxu0 %v221
  %239 = vmatmul.f32.gmra.mxu0 %v23
  %v240 = vpop.f32.mrf.mxu0
  %v241 = vadd.f32 0.0, %v240
  %242 = vmatmul.f32.gmra.mxu0 %v26
  %v243 = vpop.f32.mrf.mxu0
  %v244 = vadd.f32 0.0, %v243
  %245 = vmatmul.f32.gmra.mxu0 %v29
  %v246 = vpop.f32.mrf.mxu0
  %v247 = vadd.f32 0.0, %v246
  %248 = vdwg.mxu0
  %v250 = vsel %vm21, %v241, 0
  %v253 = vsel %vm21, %v244, 0
  %v256 = vsel %vm21, %v247, 0
  %258 = vmatpush.msra.mxu0 0.0
  %259 = vmatpush.msra.mxu0 0.0
  %260 = vmatpush.msra.mxu0 0.0
  %261 = vmatpush.msra.mxu0 0.0
  %262 = vmatpush.msra.mxu0 0.0
  %263 = vmatpush.msra.mxu0 0.0
  %264 = vmatpush.msra.mxu0 0.0
  %265 = vmatpush.msra.mxu0 0.0
  %266 = vmatpush.msra.mxu0 0.0
  %267 = vmatpush.msra.mxu0 0.0
  %268 = vmatpush.msra.mxu0 0.0
  %269 = vmatpush.msra.mxu0 0.0
  %270 = vmatpush.msra.mxu0 0.0
  %271 = vmatpush.msra.mxu0 0.0
  %272 = vmatpush.msra.mxu0 %v18
  %273 = vmatpush.msra.mxu0 %v17
  %274 = vmatmul.f32.gmra.mxu0 %v250
  %v275 = vpop.f32.mrf.mxu0
  %v276 = vadd.f32 0.0, %v275
  %277 = vmatmul.f32.gmra.mxu0 %v253
  %v278 = vpop.f32.mrf.mxu0
  %v279 = vadd.f32 0.0, %v278
  %280 = vmatmul.f32.gmra.mxu0 %v256
  %v281 = vpop.f32.mrf.mxu0
  %v282 = vadd.f32 0.0, %v281
  %283 = vdwg.mxu0
  %s284 = scalar_lea.vmem %s0, 64
  %v285 = vld [vmem:[%s284] sm:$0xff]
  %v286 = vld [vmem:[%s284 + $0x8] sm:$0xff]
  %287 = vmatpush.msra.mxu0 0.0
  %288 = vmatpush.msra.mxu0 0.0
  %289 = vmatpush.msra.mxu0 0.0
  %290 = vmatpush.msra.mxu0 0.0
  %291 = vmatpush.msra.mxu0 0.0
  %292 = vmatpush.msra.mxu0 0.0
  %293 = vmatpush.msra.mxu0 0.0
  %294 = vmatpush.msra.mxu0 0.0
  %295 = vmatpush.msra.mxu0 0.0
  %296 = vmatpush.msra.mxu0 0.0
  %297 = vmatpush.msra.mxu0 0.0
  %298 = vmatpush.msra.mxu0 0.0
  %299 = vmatpush.msra.mxu0 0.0
  %300 = vmatpush.msra.mxu0 0.0
  %301 = vmatpush.msra.mxu0 %v286
  %302 = vmatpush.msra.mxu0 %v285
  %303 = vmatmul.f32.gmra.mxu0 %v23
  %v304 = vpop.f32.mrf.mxu0
  %v305 = vadd.f32 0.0, %v304
  %306 = vmatmul.f32.gmra.mxu0 %v26
  %v307 = vpop.f32.mrf.mxu0
  %v308 = vadd.f32 0.0, %v307
  %309 = vmatmul.f32.gmra.mxu0 %v29
  %v310 = vpop.f32.mrf.mxu0
  %v311 = vadd.f32 0.0, %v310
  %312 = vdwg.mxu0
  %v314 = vsel %vm21, %v305, 0
  %v317 = vsel %vm21, %v308, 0
  %v320 = vsel %vm21, %v311, 0
  %322 = vmatpush.msra.mxu0 0.0
  %323 = vmatpush.msra.mxu0 0.0
  %324 = vmatpush.msra.mxu0 0.0
  %325 = vmatpush.msra.mxu0 0.0
  %326 = vmatpush.msra.mxu0 0.0
  %327 = vmatpush.msra.mxu0 0.0
  %328 = vmatpush.msra.mxu0 0.0
  %329 = vmatpush.msra.mxu0 0.0
  %330 = vmatpush.msra.mxu0 0.0
  %331 = vmatpush.msra.mxu0 0.0
  %332 = vmatpush.msra.mxu0 0.0
  %333 = vmatpush.msra.mxu0 0.0
  %334 = vmatpush.msra.mxu0 0.0
  %335 = vmatpush.msra.mxu0 0.0
  %336 = vmatpush.msra.mxu0 %v18
  %337 = vmatpush.msra.mxu0 %v17
  %338 = vmatmul.f32.gmra.mxu0 %v314
  %v339 = vpop.f32.mrf.mxu0
  %v340 = vadd.f32 0.0, %v339
  %341 = vmatmul.f32.gmra.mxu0 %v317
  %v342 = vpop.f32.mrf.mxu0
  %v343 = vadd.f32 0.0, %v342
  %344 = vmatmul.f32.gmra.mxu0 %v320
  %v345 = vpop.f32.mrf.mxu0
  %v346 = vadd.f32 0.0, %v345
  %347 = vdwg.mxu0
  %s348 = scalar_lea.vmem %s0, 80
  %v349 = vld [vmem:[%s348] sm:$0xff]
  %v350 = vld [vmem:[%s348 + $0x8] sm:$0xff]
  %351 = vmatpush.msra.mxu0 0.0
  %352 = vmatpush.msra.mxu0 0.0
  %353 = vmatpush.msra.mxu0 0.0
  %354 = vmatpush.msra.mxu0 0.0
  %355 = vmatpush.msra.mxu0 0.0
  %356 = vmatpush.msra.mxu0 0.0
  %357 = vmatpush.msra.mxu0 0.0
  %358 = vmatpush.msra.mxu0 0.0
  %359 = vmatpush.msra.mxu0 0.0
  %360 = vmatpush.msra.mxu0 0.0
  %361 = vmatpush.msra.mxu0 0.0
  %362 = vmatpush.msra.mxu0 0.0
  %363 = vmatpush.msra.mxu0 0.0
  %364 = vmatpush.msra.mxu0 0.0
  %365 = vmatpush.msra.mxu0 %v350
  %366 = vmatpush.msra.mxu0 %v349
  %367 = vmatmul.f32.gmra.mxu0 %v23
  %v368 = vpop.f32.mrf.mxu0
  %v369 = vadd.f32 0.0, %v368
  %370 = vmatmul.f32.gmra.mxu0 %v26
  %v371 = vpop.f32.mrf.mxu0
  %v372 = vadd.f32 0.0, %v371
  %373 = vmatmul.f32.gmra.mxu0 %v29
  %v374 = vpop.f32.mrf.mxu0
  %v375 = vadd.f32 0.0, %v374
  %376 = vdwg.mxu0
  %v378 = vsel %vm21, %v369, 0
  %v381 = vsel %vm21, %v372, 0
  %v384 = vsel %vm21, %v375, 0
  %386 = vmatpush.msra.mxu0 0.0
  %387 = vmatpush.msra.mxu0 0.0
  %388 = vmatpush.msra.mxu0 0.0
  %389 = vmatpush.msra.mxu0 0.0
  %390 = vmatpush.msra.mxu0 0.0
  %391 = vmatpush.msra.mxu0 0.0
  %392 = vmatpush.msra.mxu0 0.0
  %393 = vmatpush.msra.mxu0 0.0
  %394 = vmatpush.msra.mxu0 0.0
  %395 = vmatpush.msra.mxu0 0.0
  %396 = vmatpush.msra.mxu0 0.0
  %397 = vmatpush.msra.mxu0 0.0
  %398 = vmatpush.msra.mxu0 0.0
  %399 = vmatpush.msra.mxu0 0.0
  %400 = vmatpush.msra.mxu0 %v18
  %401 = vmatpush.msra.mxu0 %v17
  %402 = vmatmul.f32.gmra.mxu0 %v378
  %v403 = vpop.f32.mrf.mxu0
  %v404 = vadd.f32 0.0, %v403
  %405 = vmatmul.f32.gmra.mxu0 %v381
  %v406 = vpop.f32.mrf.mxu0
  %v407 = vadd.f32 0.0, %v406
  %408 = vmatmul.f32.gmra.mxu0 %v384
  %v409 = vpop.f32.mrf.mxu0
  %v410 = vadd.f32 0.0, %v409
  %411 = vdwg.mxu0
  %s412 = scalar_lea.vmem %s0, 96
  %v413 = vld [vmem:[%s412] sm:$0xff]
  %v414 = vld [vmem:[%s412 + $0x8] sm:$0xff]
  %415 = vmatpush.msra.mxu0 0.0
  %416 = vmatpush.msra.mxu0 0.0
  %417 = vmatpush.msra.mxu0 0.0
  %418 = vmatpush.msra.mxu0 0.0
  %419 = vmatpush.msra.mxu0 0.0
  %420 = vmatpush.msra.mxu0 0.0
  %421 = vmatpush.msra.mxu0 0.0
  %422 = vmatpush.msra.mxu0 0.0
  %423 = vmatpush.msra.mxu0 0.0
  %424 = vmatpush.msra.mxu0 0.0
  %425 = vmatpush.msra.mxu0 0.0
  %426 = vmatpush.msra.mxu0 0.0
  %427 = vmatpush.msra.mxu0 0.0
  %428 = vmatpush.msra.mxu0 0.0
  %429 = vmatpush.msra.mxu0 %v414
  %430 = vmatpush.msra.mxu0 %v413
  %431 = vmatmul.f32.gmra.mxu0 %v23
  %v432 = vpop.f32.mrf.mxu0
  %v433 = vadd.f32 0.0, %v432
  %434 = vmatmul.f32.gmra.mxu0 %v26
  %v435 = vpop.f32.mrf.mxu0
  %v436 = vadd.f32 0.0, %v435
  %437 = vmatmul.f32.gmra.mxu0 %v29
  %v438 = vpop.f32.mrf.mxu0
  %v439 = vadd.f32 0.0, %v438
  %440 = vdwg.mxu0
  %v442 = vsel %vm21, %v433, 0
  %v445 = vsel %vm21, %v436, 0
  %v448 = vsel %vm21, %v439, 0
  %450 = vmatpush.msra.mxu0 0.0
  %451 = vmatpush.msra.mxu0 0.0
  %452 = vmatpush.msra.mxu0 0.0
  %453 = vmatpush.msra.mxu0 0.0
  %454 = vmatpush.msra.mxu0 0.0
  %455 = vmatpush.msra.mxu0 0.0
  %456 = vmatpush.msra.mxu0 0.0
  %457 = vmatpush.msra.mxu0 0.0
  %458 = vmatpush.msra.mxu0 0.0
  %459 = vmatpush.msra.mxu0 0.0
  %460 = vmatpush.msra.mxu0 0.0
  %461 = vmatpush.msra.mxu0 0.0
  %462 = vmatpush.msra.mxu0 0.0
  %463 = vmatpush.msra.mxu0 0.0
  %464 = vmatpush.msra.mxu0 %v18
  %465 = vmatpush.msra.mxu0 %v17
  %466 = vmatmul.f32.gmra.mxu0 %v442
  %v467 = vpop.f32.mrf.mxu0
  %v468 = vadd.f32 0.0, %v467
  %469 = vmatmul.f32.gmra.mxu0 %v445
  %v470 = vpop.f32.mrf.mxu0
  %v471 = vadd.f32 0.0, %v470
  %472 = vmatmul.f32.gmra.mxu0 %v448
  %v473 = vpop.f32.mrf.mxu0
  %v474 = vadd.f32 0.0, %v473
  %475 = vdwg.mxu0
  %s476 = scalar_lea.vmem %s0, 112
  %v477 = vld [vmem:[%s476] sm:$0xff]
  %v478 = vld [vmem:[%s476 + $0x8] sm:$0xff]
  %479 = vmatpush.msra.mxu0 0.0
  %480 = vmatpush.msra.mxu0 0.0
  %481 = vmatpush.msra.mxu0 0.0
  %482 = vmatpush.msra.mxu0 0.0
  %483 = vmatpush.msra.mxu0 0.0
  %484 = vmatpush.msra.mxu0 0.0
  %485 = vmatpush.msra.mxu0 0.0
  %486 = vmatpush.msra.mxu0 0.0
  %487 = vmatpush.msra.mxu0 0.0
  %488 = vmatpush.msra.mxu0 0.0
  %489 = vmatpush.msra.mxu0 0.0
  %490 = vmatpush.msra.mxu0 0.0
  %491 = vmatpush.msra.mxu0 0.0
  %492 = vmatpush.msra.mxu0 0.0
  %493 = vmatpush.msra.mxu0 %v478
  %494 = vmatpush.msra.mxu0 %v477
  %495 = vmatmul.f32.gmra.mxu0 %v23
  %v496 = vpop.f32.mrf.mxu0
  %v497 = vadd.f32 0.0, %v496
  %498 = vmatmul.f32.gmra.mxu0 %v26
  %v499 = vpop.f32.mrf.mxu0
  %v500 = vadd.f32 0.0, %v499
  %501 = vmatmul.f32.gmra.mxu0 %v29
  %v502 = vpop.f32.mrf.mxu0
  %v503 = vadd.f32 0.0, %v502
  %504 = vdwg.mxu0
  %v506 = vsel %vm21, %v497, 0
  %v509 = vsel %vm21, %v500, 0
  %v512 = vsel %vm21, %v503, 0
  %514 = vmatpush.msra.mxu0 0.0
  %515 = vmatpush.msra.mxu0 0.0
  %516 = vmatpush.msra.mxu0 0.0
  %517 = vmatpush.msra.mxu0 0.0
  %518 = vmatpush.msra.mxu0 0.0
  %519 = vmatpush.msra.mxu0 0.0
  %520 = vmatpush.msra.mxu0 0.0
  %521 = vmatpush.msra.mxu0 0.0
  %522 = vmatpush.msra.mxu0 0.0
  %523 = vmatpush.msra.mxu0 0.0
  %524 = vmatpush.msra.mxu0 0.0
  %525 = vmatpush.msra.mxu0 0.0
  %526 = vmatpush.msra.mxu0 0.0
  %527 = vmatpush.msra.mxu0 0.0
  %528 = vmatpush.msra.mxu0 %v18
  %529 = vmatpush.msra.mxu0 %v17
  %530 = vmatmul.f32.gmra.mxu0 %v506
  %v531 = vpop.f32.mrf.mxu0
  %v532 = vadd.f32 0.0, %v531
  %533 = vmatmul.f32.gmra.mxu0 %v509
  %v534 = vpop.f32.mrf.mxu0
  %v535 = vadd.f32 0.0, %v534
  %536 = vmatmul.f32.gmra.mxu0 %v512
  %v537 = vpop.f32.mrf.mxu0
  %v538 = vadd.f32 0.0, %v537
  %539 = vdwg.mxu0
  %543 = vrot.lane.b32.xlu0 %v148, 24
  %v544 = vpop.permute.xlu0 %543
  %545 = vrot.lane.b32.xlu0 %v151, 24
  %v546 = vpop.permute.xlu0 %545
  %547 = vrot.lane.b32.xlu0 %v154, 24
  %v548 = vpop.permute.xlu0 %547
  %555 = vrot.lane.b32.xlu0 %v212, 48
  %v556 = vpop.permute.xlu0 %555
  %557 = vrot.lane.b32.xlu0 %v215, 48
  %v558 = vpop.permute.xlu0 %557
  %559 = vrot.lane.b32.xlu0 %v218, 48
  %v560 = vpop.permute.xlu0 %559
  %567 = vrot.lane.b32.xlu0 %v276, 72
  %v568 = vpop.permute.xlu0 %567
  %569 = vrot.lane.b32.xlu0 %v279, 72
  %v570 = vpop.permute.xlu0 %569
  %571 = vrot.lane.b32.xlu0 %v282, 72
  %v572 = vpop.permute.xlu0 %571
  %579 = vrot.lane.b32.xlu0 %v340, 96
  %v580 = vpop.permute.xlu0 %579
  %581 = vrot.lane.b32.xlu0 %v343, 96
  %v582 = vpop.permute.xlu0 %581
  %583 = vrot.lane.b32.xlu0 %v346, 96
  %v584 = vpop.permute.xlu0 %583
  %591 = vrot.lane.b32.xlu0 %v404, 120
  %v592 = vpop.permute.xlu0 %591
  %593 = vrot.lane.b32.xlu0 %v407, 120
  %v594 = vpop.permute.xlu0 %593
  %595 = vrot.lane.b32.xlu0 %v410, 120
  %v596 = vpop.permute.xlu0 %595
  %603 = vrot.lane.b32.xlu0 %v468, 16
  %v604 = vpop.permute.xlu0 %603
  %605 = vrot.lane.b32.xlu0 %v471, 16
  %v606 = vpop.permute.xlu0 %605
  %607 = vrot.lane.b32.xlu0 %v474, 16
  %v608 = vpop.permute.xlu0 %607
  %615 = vrot.lane.b32.xlu0 %v532, 40
  %v616 = vpop.permute.xlu0 %615
  %617 = vrot.lane.b32.xlu0 %v535, 40
  %v618 = vpop.permute.xlu0 %617
  %619 = vrot.lane.b32.xlu0 %v538, 40
  %v620 = vpop.permute.xlu0 %619
  %vm624 = vcmask 195584
  %v625 = vsel %vm624, %v84, %v544
  %v626 = vsel %vm624, %v87, %v546
  %v627 = vsel %vm624, %v90, %v548
  %vm628 = vcmask 392192
  %v629 = vsel %vm628, %v625, %v556
  %v630 = vsel %vm628, %v626, %v558
  %v631 = vsel %vm628, %v627, %v560
  %vm632 = vcmask 588800
  %v633 = vsel %vm632, %v629, %v568
  %v634 = vsel %vm632, %v630, %v570
  %v635 = vsel %vm632, %v631, %v572
  %vm636 = vcmask 785408
  %v637 = vsel %vm636, %v633, %v580
  %v638 = vsel %vm636, %v634, %v582
  %v639 = vsel %vm636, %v635, %v584
  %vm640 = vcmask 982016
  %v641 = vsel %vm640, %v637, %v592
  %v642 = vsel %vm640, %v638, %v594
  %v643 = vsel %vm640, %v639, %v596
  %v644 = vsel %vm21, %v592, %v604
  %v645 = vsel %vm21, %v594, %v606
  %v646 = vsel %vm21, %v596, %v608
  %vm647 = vcmask 326656
  %v648 = vsel %vm647, %v644, %v616
  %v649 = vsel %vm647, %v645, %v618
  %v650 = vsel %vm647, %v646, %v620
  %651 = vst [vmem:[%s3] sm:$0xff] %v641
  %vm652 = vcmask 523264
  %653 = vst.msk [vmem:[%s3 + $0x8] sm:$0xff] %vm652, %v648
  %654 = vst [vmem:[%s3 + $0x10] sm:$0xff] %v642
  %655 = vst.msk [vmem:[%s3 + $0x18] sm:$0xff] %vm652, %v649
  %656 = vst [vmem:[%s3 + $0x20] sm:$0xff] %v643
  %657 = vst.msk [vmem:[%s3 + $0x28] sm:$0xff] %vm652, %v650
  // Predicated region
  $region14: #{bilinear_resize.1} parent=0 // pred_check
    _
  $region15: #{bilinear_resize.1} parent=0 // pred_check_branch
    %659 = sbr.rel (0) target = $region17
  $region16: #{bilinear_resize.1} parent=0 // pred_region
    _
  $region17: #{bilinear_resize.1} parent=0 // pred_fallthru
    _
  // Predicated region
  $region18: #{bilinear_resize.1} parent=0 // pred_check
    _
  $region19: #{bilinear_resize.1} parent=0 // pred_check_branch
    %661 = sbr.rel (0) target = $region21
  $region20: #{bilinear_resize.1} parent=0 // pred_region
    _
  $region21: #{bilinear_resize.1} parent=0 // pred_fallthru
    _

</llo_original>
